<compile_context>
chip_gen: v7x
topology: tpu7x:2x2x1
jax: 0.10.0
libtpu: 0.0.40
codegen_flags: <defaults>
</compile_context>

<pallas_src>
import jax
import jax.numpy as jnp
from jax.experimental import pallas as pl
from jax.experimental.pallas import tpu as pltpu

# ----------------------------------------------------------------------------
# Small, StarNet-consistent hyperparameters
# ----------------------------------------------------------------------------
NUM_FLUXES = 64
NUM_FILTERS = (4, 8)
FILTER_LENGTH = 3
POOL_LENGTH = 2
NUM_HIDDEN = (32, 16)
NUM_LABELS = 3
BATCH = 2

F0, F1 = NUM_FILTERS
FL = FILTER_LENGTH
POOL = POOL_LENGTH
L = NUM_FLUXES
L1 = L - FL + 1            # conv1 'valid' output length (62)
L2 = L1 - FL + 1           # conv2 'valid' output length (60)
LP = L2 // POOL            # maxpool output length, floor like PyTorch (30)
D = F1 * LP                # flattened feature size (240)
H0, H1 = NUM_HIDDEN
NL = NUM_LABELS

HALF = L // POOL           # per-phase length (32); LP <= HALF
DPAD = F1 * HALF           # lane-dense padded flatten width (256)
NBLK = 128 // HALF         # 32-lane blocks per vreg (4)

# The de-interleaved, lane-packed formulation hard-codes these facts.
assert POOL == 2 and FL == 3 and L % 2 == 0 and LP <= HALF
assert NBLK == F0 and F1 == 2 * NBLK and NBLK * HALF == 128
assert H0 <= 128 and H1 <= 128 and NL <= 128

# Row layout of the single fc-constants VMEM block.
ROW_W2 = DPAD              # 256: fc2 weight (128 rows)
ROW_W3 = DPAD + 128        # 384: output weight (128 rows)
ROW_B1 = DPAD + 256        # 512: fc1 bias row
ROW_B2 = ROW_B1 + 1        # 513: fc2 bias row
ROW_B3 = ROW_B1 + 2        # 514: output bias row
FC_ROWS = ROW_B1 + 8       # 520 (multiple of 8)


# ----------------------------------------------------------------------------
# Fused kernel: conv1 + ReLU + conv2 + ReLU + maxpool + flatten + 3x linear
# ----------------------------------------------------------------------------
def starnet_kernel(xin_ref, cs_ref, cw2_ref, fc_ref, out_ref):
    xet = xin_ref[0]                       # (B,128): xe tiled over the 4 blocks
    xot = xin_ref[1]                       # (B,128): xo tiled

    def rot1(v):
        # Lane rotate-left by 1: out[:, j] = v[:, (j+1) % 128].  The wrapped
        # lane only ever lands in positions whose fc1 rows are zero, and it
        # stays finite, so no masking or zero-fill is needed.
        return jnp.concatenate([v[:, 1:], v[:, :1]], axis=1)

    def row(ref, r):
        return ref[r:r + 1, :]             # (1,128) lane-constant row

    xe1 = rot1(xet)
    xo1 = rot1(xot)

    # ---- conv1 + ReLU on the VPU (SMEM-scalar taps), replicated per block ---
    #   te[c][*, blk*32+j] = relu(h1[c, 2j]);  to[c][...] = relu(h1[c, 2j+1])
    te, to = [], []
    for c in range(F0):
        k0 = cs_ref[c * FL + 0]
        k1 = cs_ref[c * FL + 1]
        k2 = cs_ref[c * FL + 2]
        bc = cs_ref[F0 * FL + c]
        te.append(jnp.maximum(k0 * xet + k1 * xot + k2 * xe1 + bc, 0.0))
        to.append(jnp.maximum(k0 * xot + k1 * xe1 + k2 * xo1 + bc, 0.0))

    # ---- conv2 + ReLU + MaxPool1d(2,2), output channels packed over blocks --
    # lo accumulator holds d = 0..3 in its 4 lane blocks, hi holds d = 4..7;
    # the two pool phases stay separate so the pool is a single maximum.
    acc_e = [None, None]
    acc_o = [None, None]
    for c in range(F0):
        te1 = rot1(te[c])
        to1 = rot1(to[c])
        for h in range(2):
            t0 = row(cw2_ref, (c * FL + 0) * 2 + h)   # w2[d,c,0] in block d
            t1 = row(cw2_ref, (c * FL + 1) * 2 + h)
            t2 = row(cw2_ref, (c * FL + 2) * 2 + h)
            ce = t0 * te[c] + t1 * to[c] + t2 * te1
            co = t0 * to[c] + t1 * te1 + t2 * to1
            acc_e[h] = ce if acc_e[h] is None else acc_e[h] + ce
            acc_o[h] = co if acc_o[h] is None else acc_o[h] + co

    pieces = []
    for h in range(2):
        b2v = row(cw2_ref, 24 + h)
        # max(relu(a+b), relu(c+b)) == relu(max(a, c) + b)
        pieces.append(jnp.maximum(jnp.maximum(acc_e[h], acc_o[h]) + b2v, 0.0))

    # Channel-major flatten: lane d*HALF + l holds pool[d, l]; lanes l >= LP
    # are finite junk that hits exactly-zero rows of the padded fc1 weight.
    flat = jnp.concatenate(pieces, axis=1)             # (B, 256)

    # ---- fc1 -> ReLU -> fc2 -> ReLU -> output on the MXU --------------------
    h1 = jnp.dot(flat, fc_ref[0:DPAD, :], preferred_element_type=jnp.float32)
    h1 = jnp.maximum(h1 + row(fc_ref, ROW_B1), 0.0)
    h2 = jnp.dot(h1, fc_ref[ROW_W2:ROW_W2 + 128, :],
                 preferred_element_type=jnp.float32)
    h2 = jnp.maximum(h2 + row(fc_ref, ROW_B2), 0.0)
    o = jnp.dot(h2, fc_ref[ROW_W3:ROW_W3 + 128, :],
                preferred_element_type=jnp.float32)
    out_ref[...] = (o + row(fc_ref, ROW_B3))[:, :NL]


def starnet_fused(xin, cs, cw2, fc):
    vmem = pl.BlockSpec(memory_space=pltpu.MemorySpace.VMEM)
    smem = pl.BlockSpec(memory_space=pltpu.MemorySpace.SMEM)
    return pl.pallas_call(
        starnet_kernel,
        out_shape=jax.ShapeDtypeStruct((BATCH, NL), jnp.float32),
        in_specs=[vmem, smem, vmem, vmem],
        out_specs=vmem,
    )(xin, cs, cw2, fc)


# ----------------------------------------------------------------------------
# One-time weight plumbing (everything x-independent lives here)
# ----------------------------------------------------------------------------
def prepare_params(params):
    (w1, b1, w2, b2, fw1, fb1, fw2, fb2, fwo, fbo) = params

    # conv1 taps + bias as 16 SMEM scalars: [w1[c,0,k] at c*FL+k, b1[c] at 12+c]
    cs = jnp.concatenate([w1.reshape(-1), b1]).astype(jnp.float32)

    # conv2 taps/bias as lane-constant rows: row (c*FL+k)*2 + half carries
    # w2[half*4 + d', c, k] replicated over lanes [d'*HALF, (d'+1)*HALF).
    rows = []
    for c in range(F0):
        for k in range(FL):
            for h in range(2):
                rows.append(jnp.repeat(w2[h * NBLK:(h + 1) * NBLK, c, k], HALF))
    rows.append(jnp.repeat(b2[:NBLK], HALF))           # row 24: bias d=0..3
    rows.append(jnp.repeat(b2[NBLK:], HALF))           # row 25: bias d=4..7
    cw2 = jnp.stack(rows).astype(jnp.float32)          # (26, 128)

    # All fc weights/biases in one lane-dense VMEM block.  fc1's weight absorbs
    # the PyTorch channel-major flatten and the LP->HALF lane padding; the
    # padded rows stay exactly zero (that is what neutralizes the junk lanes).
    w1p = jnp.zeros((F1, HALF, H0), jnp.float32)
    w1p = w1p.at[:, :LP, :].set(jnp.transpose(fw1.reshape(H0, F1, LP), (1, 2, 0)))
    w1p = w1p.reshape(DPAD, H0)
    fc = jnp.zeros((FC_ROWS, 128), jnp.float32)
    fc = fc.at[0:DPAD, :H0].set(w1p)
    fc = fc.at[ROW_W2:ROW_W2 + H0, :H1].set(fw2.T)
    fc = fc.at[ROW_W3:ROW_W3 + H1, :NL].set(fwo.T)
    fc = fc.at[ROW_B1, :H0].set(fb1)
    fc = fc.at[ROW_B2, :H1].set(fb2)
    fc = fc.at[ROW_B3, :NL].set(fbo)
    return cs, cw2, fc


# ----------------------------------------------------------------------------
# Per-call forward: only x de-interleave / lane tiling + the pallas_call
# ----------------------------------------------------------------------------
@jax.jit
def starnet_forward(x_ncl, prepared):
    cs, cw2, fc = prepared
    x = x_ncl.reshape(BATCH, L)            # squeeze the singleton channel dim
    xe = x[:, 0::2]                        # (B, HALF) even length positions
    xo = x[:, 1::2]                        # (B, HALF) odd length positions
    xin = jnp.stack([jnp.tile(xe, (1, NBLK)),
                     jnp.tile(xo, (1, NBLK))])          # (2, B, 128)
    return starnet_fused(xin, cs, cw2, fc)


# ----------------------------------------------------------------------------
# Deterministic synthetic parameters (shapes follow nn.Module __init__)
# ----------------------------------------------------------------------------
def init_params(key):
    ks = jax.random.split(key, 10)
    s = 0.1
    w1 = s * jax.random.normal(ks[0], (F0, 1, FL), jnp.float32)    # conv1.weight
    b1 = s * jax.random.normal(ks[1], (F0,), jnp.float32)          # conv1.bias
    w2 = s * jax.random.normal(ks[2], (F1, F0, FL), jnp.float32)   # conv2.weight
    b2 = s * jax.random.normal(ks[3], (F1,), jnp.float32)          # conv2.bias
    fw1 = s * jax.random.normal(ks[4], (H0, D), jnp.float32)       # fc1.weight
    fb1 = s * jax.random.normal(ks[5], (H0,), jnp.float32)         # fc1.bias
    fw2 = s * jax.random.normal(ks[6], (H1, H0), jnp.float32)      # fc2.weight
    fb2 = s * jax.random.normal(ks[7], (H1,), jnp.float32)         # fc2.bias
    fwo = s * jax.random.normal(ks[8], (NL, H1), jnp.float32)      # output.weight
    fbo = s * jax.random.normal(ks[9], (NL,), jnp.float32)         # output.bias
    return (w1, b1, w2, b2, fw1, fb1, fw2, fb2, fwo, fbo)


# ----------------------------------------------------------------------------
# Pure-JAX reference (mirrors the PyTorch forward semantics, f32-exact dots)
# ----------------------------------------------------------------------------
def reference_forward(x_ncl, params):
    (w1, b1, w2, b2, fw1, fb1, fw2, fb2, fwo, fbo) = params
    hp = jax.lax.Precision.HIGHEST

    def conv1d(x, w, b):
        k_len = w.shape[2]
        lout = x.shape[2] - k_len + 1
        out = jnp.zeros((x.shape[0], w.shape[0], lout), jnp.float32)
        for k in range(k_len):
            out = out + jnp.einsum('bcl,oc->bol', x[:, :, k:k + lout],
                                   w[:, :, k], precision=hp)
        return out + b[None, :, None]

    h = jax.nn.relu(conv1d(x_ncl, w1, b1))
    h = jax.nn.relu(conv1d(h, w2, b2))
    lh = h.shape[2]
    lp = lh // POOL
    h = h[:, :, :lp * POOL].reshape(h.shape[0], h.shape[1], lp, POOL).max(axis=-1)
    flat = h.reshape(h.shape[0], -1)
    h = jax.nn.relu(jnp.dot(flat, fw1.T, precision=hp) + fb1)
    h = jax.nn.relu(jnp.dot(h, fw2.T, precision=hp) + fb2)
    return jnp.dot(h, fwo.T, precision=hp) + fbo


if __name__ == "__main__":
    key = jax.random.PRNGKey(0)
    pkey, xkey = jax.random.split(key)
    params = init_params(pkey)
    x = jax.random.normal(xkey, (BATCH, 1, NUM_FLUXES), jnp.float32)

    prepared = jax.tree_util.tree_map(jax.block_until_ready,
                                      prepare_params(params))   # one-time

    out = jax.block_until_ready(starnet_forward(x, prepared))
    ref = reference_forward(x, params)

    assert out.shape == (BATCH, NUM_LABELS)
    # Conv/pool path is exact f32 on the VPU; the fc layers run on the MXU,
    # whose f32 input handling may round, hence a few-1e-4 tolerance (the
    # zero-padded MXU columns contribute exactly zero, so numerics match the
    # previous, verified version).
    assert jnp.allclose(out, ref, rtol=1e-3, atol=5e-4), "mismatch vs reference"

    print("KERNEL_OK")
</pallas_src>

<mosaic_0001>
module attributes {stable_mosaic.version = 11 : i64} {
  func.func @starnet_kernel(%arg0: memref<2x2x128xf32, #tpu.memory_space<vmem>>, %arg1: memref<16xf32, #tpu.memory_space<smem>>, %arg2: memref<26x128xf32, #tpu.memory_space<vmem>>, %arg3: memref<520x128xf32, #tpu.memory_space<vmem>>, %arg4: memref<2x3xf32, #tpu.memory_space<vmem>>) attributes {dimension_semantics = [], scalar_prefetch = 0 : i64, scratch_operands = 0 : i64, tpu.core_type = #tpu.core_type<tc>} {
    %c0 = arith.constant 0 : index
    %c0_0 = arith.constant 0 : index
    %c0_1 = arith.constant 0 : index
    %0 = vector.load %arg0[%c0, %c0_0, %c0_1] : memref<2x2x128xf32, #tpu.memory_space<vmem>>, vector<1x2x128xf32>
    %1 = vector.shape_cast %0 : vector<1x2x128xf32> to vector<2x128xf32>
    %c1 = arith.constant 1 : index
    %c0_2 = arith.constant 0 : index
    %c0_3 = arith.constant 0 : index
    %2 = vector.load %arg0[%c1, %c0_2, %c0_3] : memref<2x2x128xf32, #tpu.memory_space<vmem>>, vector<1x2x128xf32>
    %3 = vector.shape_cast %2 : vector<1x2x128xf32> to vector<2x128xf32>
    %4 = vector.extract_strided_slice %1 {offsets = [0, 1], sizes = [2, 127], strides = [1, 1]} : vector<2x128xf32> to vector<2x127xf32>
    %5 = vector.extract_strided_slice %1 {offsets = [0, 0], sizes = [2, 1], strides = [1, 1]} : vector<2x128xf32> to vector<2x1xf32>
    %6 = tpu.concatenate %4, %5 in 1 : vector<2x127xf32>, vector<2x1xf32> -> vector<2x128xf32>
    %7 = vector.extract_strided_slice %3 {offsets = [0, 1], sizes = [2, 127], strides = [1, 1]} : vector<2x128xf32> to vector<2x127xf32>
    %8 = vector.extract_strided_slice %3 {offsets = [0, 0], sizes = [2, 1], strides = [1, 1]} : vector<2x128xf32> to vector<2x1xf32>
    %9 = tpu.concatenate %7, %8 in 1 : vector<2x127xf32>, vector<2x1xf32> -> vector<2x128xf32>
    %c0_4 = arith.constant 0 : index
    %10 = memref.load %arg1[%c0_4] : memref<16xf32, #tpu.memory_space<smem>>
    %c1_5 = arith.constant 1 : index
    %11 = memref.load %arg1[%c1_5] : memref<16xf32, #tpu.memory_space<smem>>
    %c2 = arith.constant 2 : index
    %12 = memref.load %arg1[%c2] : memref<16xf32, #tpu.memory_space<smem>>
    %c12 = arith.constant 12 : index
    %13 = memref.load %arg1[%c12] : memref<16xf32, #tpu.memory_space<smem>>
    %14 = vector.broadcast %10 : f32 to vector<2x128xf32>
    %15 = arith.mulf %14, %1 : vector<2x128xf32>
    %16 = vector.broadcast %11 : f32 to vector<2x128xf32>
    %17 = arith.mulf %16, %3 : vector<2x128xf32>
    %18 = arith.addf %15, %17 : vector<2x128xf32>
    %19 = vector.broadcast %12 : f32 to vector<2x128xf32>
    %20 = arith.mulf %19, %6 : vector<2x128xf32>
    %21 = arith.addf %18, %20 : vector<2x128xf32>
    %22 = vector.broadcast %13 : f32 to vector<2x128xf32>
    %23 = arith.addf %21, %22 : vector<2x128xf32>
    %cst = arith.constant 0.000000e+00 : f32
    %24 = vector.broadcast %cst : f32 to vector<2x128xf32>
    %25 = arith.maximumf %23, %24 : vector<2x128xf32>
    %26 = vector.broadcast %10 : f32 to vector<2x128xf32>
    %27 = arith.mulf %26, %3 : vector<2x128xf32>
    %28 = vector.broadcast %11 : f32 to vector<2x128xf32>
    %29 = arith.mulf %28, %6 : vector<2x128xf32>
    %30 = arith.addf %27, %29 : vector<2x128xf32>
    %31 = vector.broadcast %12 : f32 to vector<2x128xf32>
    %32 = arith.mulf %31, %9 : vector<2x128xf32>
    %33 = arith.addf %30, %32 : vector<2x128xf32>
    %34 = vector.broadcast %13 : f32 to vector<2x128xf32>
    %35 = arith.addf %33, %34 : vector<2x128xf32>
    %cst_6 = arith.constant 0.000000e+00 : f32
    %36 = vector.broadcast %cst_6 : f32 to vector<2x128xf32>
    %37 = arith.maximumf %35, %36 : vector<2x128xf32>
    %c3 = arith.constant 3 : index
    %38 = memref.load %arg1[%c3] : memref<16xf32, #tpu.memory_space<smem>>
    %c4 = arith.constant 4 : index
    %39 = memref.load %arg1[%c4] : memref<16xf32, #tpu.memory_space<smem>>
    %c5 = arith.constant 5 : index
    %40 = memref.load %arg1[%c5] : memref<16xf32, #tpu.memory_space<smem>>
    %c13 = arith.constant 13 : index
    %41 = memref.load %arg1[%c13] : memref<16xf32, #tpu.memory_space<smem>>
    %42 = vector.broadcast %38 : f32 to vector<2x128xf32>
    %43 = arith.mulf %42, %1 : vector<2x128xf32>
    %44 = vector.broadcast %39 : f32 to vector<2x128xf32>
    %45 = arith.mulf %44, %3 : vector<2x128xf32>
    %46 = arith.addf %43, %45 : vector<2x128xf32>
    %47 = vector.broadcast %40 : f32 to vector<2x128xf32>
    %48 = arith.mulf %47, %6 : vector<2x128xf32>
    %49 = arith.addf %46, %48 : vector<2x128xf32>
    %50 = vector.broadcast %41 : f32 to vector<2x128xf32>
    %51 = arith.addf %49, %50 : vector<2x128xf32>
    %cst_7 = arith.constant 0.000000e+00 : f32
    %52 = vector.broadcast %cst_7 : f32 to vector<2x128xf32>
    %53 = arith.maximumf %51, %52 : vector<2x128xf32>
    %54 = vector.broadcast %38 : f32 to vector<2x128xf32>
    %55 = arith.mulf %54, %3 : vector<2x128xf32>
    %56 = vector.broadcast %39 : f32 to vector<2x128xf32>
    %57 = arith.mulf %56, %6 : vector<2x128xf32>
    %58 = arith.addf %55, %57 : vector<2x128xf32>
    %59 = vector.broadcast %40 : f32 to vector<2x128xf32>
    %60 = arith.mulf %59, %9 : vector<2x128xf32>
    %61 = arith.addf %58, %60 : vector<2x128xf32>
    %62 = vector.broadcast %41 : f32 to vector<2x128xf32>
    %63 = arith.addf %61, %62 : vector<2x128xf32>
    %cst_8 = arith.constant 0.000000e+00 : f32
    %64 = vector.broadcast %cst_8 : f32 to vector<2x128xf32>
    %65 = arith.maximumf %63, %64 : vector<2x128xf32>
    %c6 = arith.constant 6 : index
    %66 = memref.load %arg1[%c6] : memref<16xf32, #tpu.memory_space<smem>>
    %c7 = arith.constant 7 : index
    %67 = memref.load %arg1[%c7] : memref<16xf32, #tpu.memory_space<smem>>
    %c8 = arith.constant 8 : index
    %68 = memref.load %arg1[%c8] : memref<16xf32, #tpu.memory_space<smem>>
    %c14 = arith.constant 14 : index
    %69 = memref.load %arg1[%c14] : memref<16xf32, #tpu.memory_space<smem>>
    %70 = vector.broadcast %66 : f32 to vector<2x128xf32>
    %71 = arith.mulf %70, %1 : vector<2x128xf32>
    %72 = vector.broadcast %67 : f32 to vector<2x128xf32>
    %73 = arith.mulf %72, %3 : vector<2x128xf32>
    %74 = arith.addf %71, %73 : vector<2x128xf32>
    %75 = vector.broadcast %68 : f32 to vector<2x128xf32>
    %76 = arith.mulf %75, %6 : vector<2x128xf32>
    %77 = arith.addf %74, %76 : vector<2x128xf32>
    %78 = vector.broadcast %69 : f32 to vector<2x128xf32>
    %79 = arith.addf %77, %78 : vector<2x128xf32>
    %cst_9 = arith.constant 0.000000e+00 : f32
    %80 = vector.broadcast %cst_9 : f32 to vector<2x128xf32>
    %81 = arith.maximumf %79, %80 : vector<2x128xf32>
    %82 = vector.broadcast %66 : f32 to vector<2x128xf32>
    %83 = arith.mulf %82, %3 : vector<2x128xf32>
    %84 = vector.broadcast %67 : f32 to vector<2x128xf32>
    %85 = arith.mulf %84, %6 : vector<2x128xf32>
    %86 = arith.addf %83, %85 : vector<2x128xf32>
    %87 = vector.broadcast %68 : f32 to vector<2x128xf32>
    %88 = arith.mulf %87, %9 : vector<2x128xf32>
    %89 = arith.addf %86, %88 : vector<2x128xf32>
    %90 = vector.broadcast %69 : f32 to vector<2x128xf32>
    %91 = arith.addf %89, %90 : vector<2x128xf32>
    %cst_10 = arith.constant 0.000000e+00 : f32
    %92 = vector.broadcast %cst_10 : f32 to vector<2x128xf32>
    %93 = arith.maximumf %91, %92 : vector<2x128xf32>
    %c9 = arith.constant 9 : index
    %94 = memref.load %arg1[%c9] : memref<16xf32, #tpu.memory_space<smem>>
    %c10 = arith.constant 10 : index
    %95 = memref.load %arg1[%c10] : memref<16xf32, #tpu.memory_space<smem>>
    %c11 = arith.constant 11 : index
    %96 = memref.load %arg1[%c11] : memref<16xf32, #tpu.memory_space<smem>>
    %c15 = arith.constant 15 : index
    %97 = memref.load %arg1[%c15] : memref<16xf32, #tpu.memory_space<smem>>
    %98 = vector.broadcast %94 : f32 to vector<2x128xf32>
    %99 = arith.mulf %98, %1 : vector<2x128xf32>
    %100 = vector.broadcast %95 : f32 to vector<2x128xf32>
    %101 = arith.mulf %100, %3 : vector<2x128xf32>
    %102 = arith.addf %99, %101 : vector<2x128xf32>
    %103 = vector.broadcast %96 : f32 to vector<2x128xf32>
    %104 = arith.mulf %103, %6 : vector<2x128xf32>
    %105 = arith.addf %102, %104 : vector<2x128xf32>
    %106 = vector.broadcast %97 : f32 to vector<2x128xf32>
    %107 = arith.addf %105, %106 : vector<2x128xf32>
    %cst_11 = arith.constant 0.000000e+00 : f32
    %108 = vector.broadcast %cst_11 : f32 to vector<2x128xf32>
    %109 = arith.maximumf %107, %108 : vector<2x128xf32>
    %110 = vector.broadcast %94 : f32 to vector<2x128xf32>
    %111 = arith.mulf %110, %3 : vector<2x128xf32>
    %112 = vector.broadcast %95 : f32 to vector<2x128xf32>
    %113 = arith.mulf %112, %6 : vector<2x128xf32>
    %114 = arith.addf %111, %113 : vector<2x128xf32>
    %115 = vector.broadcast %96 : f32 to vector<2x128xf32>
    %116 = arith.mulf %115, %9 : vector<2x128xf32>
    %117 = arith.addf %114, %116 : vector<2x128xf32>
    %118 = vector.broadcast %97 : f32 to vector<2x128xf32>
    %119 = arith.addf %117, %118 : vector<2x128xf32>
    %cst_12 = arith.constant 0.000000e+00 : f32
    %120 = vector.broadcast %cst_12 : f32 to vector<2x128xf32>
    %121 = arith.maximumf %119, %120 : vector<2x128xf32>
    %122 = vector.extract_strided_slice %25 {offsets = [0, 1], sizes = [2, 127], strides = [1, 1]} : vector<2x128xf32> to vector<2x127xf32>
    %123 = vector.extract_strided_slice %25 {offsets = [0, 0], sizes = [2, 1], strides = [1, 1]} : vector<2x128xf32> to vector<2x1xf32>
    %124 = tpu.concatenate %122, %123 in 1 : vector<2x127xf32>, vector<2x1xf32> -> vector<2x128xf32>
    %125 = vector.extract_strided_slice %37 {offsets = [0, 1], sizes = [2, 127], strides = [1, 1]} : vector<2x128xf32> to vector<2x127xf32>
    %126 = vector.extract_strided_slice %37 {offsets = [0, 0], sizes = [2, 1], strides = [1, 1]} : vector<2x128xf32> to vector<2x1xf32>
    %127 = tpu.concatenate %125, %126 in 1 : vector<2x127xf32>, vector<2x1xf32> -> vector<2x128xf32>
    %c0_13 = arith.constant 0 : index
    %c0_14 = arith.constant 0 : index
    %128 = vector.load %arg2[%c0_13, %c0_14] : memref<26x128xf32, #tpu.memory_space<vmem>>, vector<1x128xf32>
    %c2_15 = arith.constant 2 : index
    %c0_16 = arith.constant 0 : index
    %129 = vector.load %arg2[%c2_15, %c0_16] : memref<26x128xf32, #tpu.memory_space<vmem>>, vector<1x128xf32>
    %c4_17 = arith.constant 4 : index
    %c0_18 = arith.constant 0 : index
    %130 = vector.load %arg2[%c4_17, %c0_18] : memref<26x128xf32, #tpu.memory_space<vmem>>, vector<1x128xf32>
    %131 = vector.broadcast %128 : vector<1x128xf32> to vector<2x128xf32>
    %132 = arith.mulf %131, %25 : vector<2x128xf32>
    %133 = vector.broadcast %129 : vector<1x128xf32> to vector<2x128xf32>
    %134 = arith.mulf %133, %37 : vector<2x128xf32>
    %135 = arith.addf %132, %134 : vector<2x128xf32>
    %136 = vector.broadcast %130 : vector<1x128xf32> to vector<2x128xf32>
    %137 = arith.mulf %136, %124 : vector<2x128xf32>
    %138 = arith.addf %135, %137 : vector<2x128xf32>
    %139 = vector.broadcast %128 : vector<1x128xf32> to vector<2x128xf32>
    %140 = arith.mulf %139, %37 : vector<2x128xf32>
    %141 = vector.broadcast %129 : vector<1x128xf32> to vector<2x128xf32>
    %142 = arith.mulf %141, %124 : vector<2x128xf32>
    %143 = arith.addf %140, %142 : vector<2x128xf32>
    %144 = vector.broadcast %130 : vector<1x128xf32> to vector<2x128xf32>
    %145 = arith.mulf %144, %127 : vector<2x128xf32>
    %146 = arith.addf %143, %145 : vector<2x128xf32>
    %c1_19 = arith.constant 1 : index
    %c0_20 = arith.constant 0 : index
    %147 = vector.load %arg2[%c1_19, %c0_20] : memref<26x128xf32, #tpu.memory_space<vmem>>, vector<1x128xf32>
    %c3_21 = arith.constant 3 : index
    %c0_22 = arith.constant 0 : index
    %148 = vector.load %arg2[%c3_21, %c0_22] : memref<26x128xf32, #tpu.memory_space<vmem>>, vector<1x128xf32>
    %c5_23 = arith.constant 5 : index
    %c0_24 = arith.constant 0 : index
    %149 = vector.load %arg2[%c5_23, %c0_24] : memref<26x128xf32, #tpu.memory_space<vmem>>, vector<1x128xf32>
    %150 = vector.broadcast %147 : vector<1x128xf32> to vector<2x128xf32>
    %151 = arith.mulf %150, %25 : vector<2x128xf32>
    %152 = vector.broadcast %148 : vector<1x128xf32> to vector<2x128xf32>
    %153 = arith.mulf %152, %37 : vector<2x128xf32>
    %154 = arith.addf %151, %153 : vector<2x128xf32>
    %155 = vector.broadcast %149 : vector<1x128xf32> to vector<2x128xf32>
    %156 = arith.mulf %155, %124 : vector<2x128xf32>
    %157 = arith.addf %154, %156 : vector<2x128xf32>
    %158 = vector.broadcast %147 : vector<1x128xf32> to vector<2x128xf32>
    %159 = arith.mulf %158, %37 : vector<2x128xf32>
    %160 = vector.broadcast %148 : vector<1x128xf32> to vector<2x128xf32>
    %161 = arith.mulf %160, %124 : vector<2x128xf32>
    %162 = arith.addf %159, %161 : vector<2x128xf32>
    %163 = vector.broadcast %149 : vector<1x128xf32> to vector<2x128xf32>
    %164 = arith.mulf %163, %127 : vector<2x128xf32>
    %165 = arith.addf %162, %164 : vector<2x128xf32>
    %166 = vector.extract_strided_slice %53 {offsets = [0, 1], sizes = [2, 127], strides = [1, 1]} : vector<2x128xf32> to vector<2x127xf32>
    %167 = vector.extract_strided_slice %53 {offsets = [0, 0], sizes = [2, 1], strides = [1, 1]} : vector<2x128xf32> to vector<2x1xf32>
    %168 = tpu.concatenate %166, %167 in 1 : vector<2x127xf32>, vector<2x1xf32> -> vector<2x128xf32>
    %169 = vector.extract_strided_slice %65 {offsets = [0, 1], sizes = [2, 127], strides = [1, 1]} : vector<2x128xf32> to vector<2x127xf32>
    %170 = vector.extract_strided_slice %65 {offsets = [0, 0], sizes = [2, 1], strides = [1, 1]} : vector<2x128xf32> to vector<2x1xf32>
    %171 = tpu.concatenate %169, %170 in 1 : vector<2x127xf32>, vector<2x1xf32> -> vector<2x128xf32>
    %c6_25 = arith.constant 6 : index
    %c0_26 = arith.constant 0 : index
    %172 = vector.load %arg2[%c6_25, %c0_26] : memref<26x128xf32, #tpu.memory_space<vmem>>, vector<1x128xf32>
    %c8_27 = arith.constant 8 : index
    %c0_28 = arith.constant 0 : index
    %173 = vector.load %arg2[%c8_27, %c0_28] : memref<26x128xf32, #tpu.memory_space<vmem>>, vector<1x128xf32>
    %c10_29 = arith.constant 10 : index
    %c0_30 = arith.constant 0 : index
    %174 = vector.load %arg2[%c10_29, %c0_30] : memref<26x128xf32, #tpu.memory_space<vmem>>, vector<1x128xf32>
    %175 = vector.broadcast %172 : vector<1x128xf32> to vector<2x128xf32>
    %176 = arith.mulf %175, %53 : vector<2x128xf32>
    %177 = vector.broadcast %173 : vector<1x128xf32> to vector<2x128xf32>
    %178 = arith.mulf %177, %65 : vector<2x128xf32>
    %179 = arith.addf %176, %178 : vector<2x128xf32>
    %180 = vector.broadcast %174 : vector<1x128xf32> to vector<2x128xf32>
    %181 = arith.mulf %180, %168 : vector<2x128xf32>
    %182 = arith.addf %179, %181 : vector<2x128xf32>
    %183 = vector.broadcast %172 : vector<1x128xf32> to vector<2x128xf32>
    %184 = arith.mulf %183, %65 : vector<2x128xf32>
    %185 = vector.broadcast %173 : vector<1x128xf32> to vector<2x128xf32>
    %186 = arith.mulf %185, %168 : vector<2x128xf32>
    %187 = arith.addf %184, %186 : vector<2x128xf32>
    %188 = vector.broadcast %174 : vector<1x128xf32> to vector<2x128xf32>
    %189 = arith.mulf %188, %171 : vector<2x128xf32>
    %190 = arith.addf %187, %189 : vector<2x128xf32>
    %191 = arith.addf %138, %182 : vector<2x128xf32>
    %192 = arith.addf %146, %190 : vector<2x128xf32>
    %c7_31 = arith.constant 7 : index
    %c0_32 = arith.constant 0 : index
    %193 = vector.load %arg2[%c7_31, %c0_32] : memref<26x128xf32, #tpu.memory_space<vmem>>, vector<1x128xf32>
    %c9_33 = arith.constant 9 : index
    %c0_34 = arith.constant 0 : index
    %194 = vector.load %arg2[%c9_33, %c0_34] : memref<26x128xf32, #tpu.memory_space<vmem>>, vector<1x128xf32>
    %c11_35 = arith.constant 11 : index
    %c0_36 = arith.constant 0 : index
    %195 = vector.load %arg2[%c11_35, %c0_36] : memref<26x128xf32, #tpu.memory_space<vmem>>, vector<1x128xf32>
    %196 = vector.broadcast %193 : vector<1x128xf32> to vector<2x128xf32>
    %197 = arith.mulf %196, %53 : vector<2x128xf32>
    %198 = vector.broadcast %194 : vector<1x128xf32> to vector<2x128xf32>
    %199 = arith.mulf %198, %65 : vector<2x128xf32>
    %200 = arith.addf %197, %199 : vector<2x128xf32>
    %201 = vector.broadcast %195 : vector<1x128xf32> to vector<2x128xf32>
    %202 = arith.mulf %201, %168 : vector<2x128xf32>
    %203 = arith.addf %200, %202 : vector<2x128xf32>
    %204 = vector.broadcast %193 : vector<1x128xf32> to vector<2x128xf32>
    %205 = arith.mulf %204, %65 : vector<2x128xf32>
    %206 = vector.broadcast %194 : vector<1x128xf32> to vector<2x128xf32>
    %207 = arith.mulf %206, %168 : vector<2x128xf32>
    %208 = arith.addf %205, %207 : vector<2x128xf32>
    %209 = vector.broadcast %195 : vector<1x128xf32> to vector<2x128xf32>
    %210 = arith.mulf %209, %171 : vector<2x128xf32>
    %211 = arith.addf %208, %210 : vector<2x128xf32>
    %212 = arith.addf %157, %203 : vector<2x128xf32>
    %213 = arith.addf %165, %211 : vector<2x128xf32>
    %214 = vector.extract_strided_slice %81 {offsets = [0, 1], sizes = [2, 127], strides = [1, 1]} : vector<2x128xf32> to vector<2x127xf32>
    %215 = vector.extract_strided_slice %81 {offsets = [0, 0], sizes = [2, 1], strides = [1, 1]} : vector<2x128xf32> to vector<2x1xf32>
    %216 = tpu.concatenate %214, %215 in 1 : vector<2x127xf32>, vector<2x1xf32> -> vector<2x128xf32>
    %217 = vector.extract_strided_slice %93 {offsets = [0, 1], sizes = [2, 127], strides = [1, 1]} : vector<2x128xf32> to vector<2x127xf32>
    %218 = vector.extract_strided_slice %93 {offsets = [0, 0], sizes = [2, 1], strides = [1, 1]} : vector<2x128xf32> to vector<2x1xf32>
    %219 = tpu.concatenate %217, %218 in 1 : vector<2x127xf32>, vector<2x1xf32> -> vector<2x128xf32>
    %c12_37 = arith.constant 12 : index
    %c0_38 = arith.constant 0 : index
    %220 = vector.load %arg2[%c12_37, %c0_38] : memref<26x128xf32, #tpu.memory_space<vmem>>, vector<1x128xf32>
    %c14_39 = arith.constant 14 : index
    %c0_40 = arith.constant 0 : index
    %221 = vector.load %arg2[%c14_39, %c0_40] : memref<26x128xf32, #tpu.memory_space<vmem>>, vector<1x128xf32>
    %c16 = arith.constant 16 : index
    %c0_41 = arith.constant 0 : index
    %222 = vector.load %arg2[%c16, %c0_41] : memref<26x128xf32, #tpu.memory_space<vmem>>, vector<1x128xf32>
    %223 = vector.broadcast %220 : vector<1x128xf32> to vector<2x128xf32>
    %224 = arith.mulf %223, %81 : vector<2x128xf32>
    %225 = vector.broadcast %221 : vector<1x128xf32> to vector<2x128xf32>
    %226 = arith.mulf %225, %93 : vector<2x128xf32>
    %227 = arith.addf %224, %226 : vector<2x128xf32>
    %228 = vector.broadcast %222 : vector<1x128xf32> to vector<2x128xf32>
    %229 = arith.mulf %228, %216 : vector<2x128xf32>
    %230 = arith.addf %227, %229 : vector<2x128xf32>
    %231 = vector.broadcast %220 : vector<1x128xf32> to vector<2x128xf32>
    %232 = arith.mulf %231, %93 : vector<2x128xf32>
    %233 = vector.broadcast %221 : vector<1x128xf32> to vector<2x128xf32>
    %234 = arith.mulf %233, %216 : vector<2x128xf32>
    %235 = arith.addf %232, %234 : vector<2x128xf32>
    %236 = vector.broadcast %222 : vector<1x128xf32> to vector<2x128xf32>
    %237 = arith.mulf %236, %219 : vector<2x128xf32>
    %238 = arith.addf %235, %237 : vector<2x128xf32>
    %239 = arith.addf %191, %230 : vector<2x128xf32>
    %240 = arith.addf %192, %238 : vector<2x128xf32>
    %c13_42 = arith.constant 13 : index
    %c0_43 = arith.constant 0 : index
    %241 = vector.load %arg2[%c13_42, %c0_43] : memref<26x128xf32, #tpu.memory_space<vmem>>, vector<1x128xf32>
    %c15_44 = arith.constant 15 : index
    %c0_45 = arith.constant 0 : index
    %242 = vector.load %arg2[%c15_44, %c0_45] : memref<26x128xf32, #tpu.memory_space<vmem>>, vector<1x128xf32>
    %c17 = arith.constant 17 : index
    %c0_46 = arith.constant 0 : index
    %243 = vector.load %arg2[%c17, %c0_46] : memref<26x128xf32, #tpu.memory_space<vmem>>, vector<1x128xf32>
    %244 = vector.broadcast %241 : vector<1x128xf32> to vector<2x128xf32>
    %245 = arith.mulf %244, %81 : vector<2x128xf32>
    %246 = vector.broadcast %242 : vector<1x128xf32> to vector<2x128xf32>
    %247 = arith.mulf %246, %93 : vector<2x128xf32>
    %248 = arith.addf %245, %247 : vector<2x128xf32>
    %249 = vector.broadcast %243 : vector<1x128xf32> to vector<2x128xf32>
    %250 = arith.mulf %249, %216 : vector<2x128xf32>
    %251 = arith.addf %248, %250 : vector<2x128xf32>
    %252 = vector.broadcast %241 : vector<1x128xf32> to vector<2x128xf32>
    %253 = arith.mulf %252, %93 : vector<2x128xf32>
    %254 = vector.broadcast %242 : vector<1x128xf32> to vector<2x128xf32>
    %255 = arith.mulf %254, %216 : vector<2x128xf32>
    %256 = arith.addf %253, %255 : vector<2x128xf32>
    %257 = vector.broadcast %243 : vector<1x128xf32> to vector<2x128xf32>
    %258 = arith.mulf %257, %219 : vector<2x128xf32>
    %259 = arith.addf %256, %258 : vector<2x128xf32>
    %260 = arith.addf %212, %251 : vector<2x128xf32>
    %261 = arith.addf %213, %259 : vector<2x128xf32>
    %262 = vector.extract_strided_slice %109 {offsets = [0, 1], sizes = [2, 127], strides = [1, 1]} : vector<2x128xf32> to vector<2x127xf32>
    %263 = vector.extract_strided_slice %109 {offsets = [0, 0], sizes = [2, 1], strides = [1, 1]} : vector<2x128xf32> to vector<2x1xf32>
    %264 = tpu.concatenate %262, %263 in 1 : vector<2x127xf32>, vector<2x1xf32> -> vector<2x128xf32>
    %265 = vector.extract_strided_slice %121 {offsets = [0, 1], sizes = [2, 127], strides = [1, 1]} : vector<2x128xf32> to vector<2x127xf32>
    %266 = vector.extract_strided_slice %121 {offsets = [0, 0], sizes = [2, 1], strides = [1, 1]} : vector<2x128xf32> to vector<2x1xf32>
    %267 = tpu.concatenate %265, %266 in 1 : vector<2x127xf32>, vector<2x1xf32> -> vector<2x128xf32>
    %c18 = arith.constant 18 : index
    %c0_47 = arith.constant 0 : index
    %268 = vector.load %arg2[%c18, %c0_47] : memref<26x128xf32, #tpu.memory_space<vmem>>, vector<1x128xf32>
    %c20 = arith.constant 20 : index
    %c0_48 = arith.constant 0 : index
    %269 = vector.load %arg2[%c20, %c0_48] : memref<26x128xf32, #tpu.memory_space<vmem>>, vector<1x128xf32>
    %c22 = arith.constant 22 : index
    %c0_49 = arith.constant 0 : index
    %270 = vector.load %arg2[%c22, %c0_49] : memref<26x128xf32, #tpu.memory_space<vmem>>, vector<1x128xf32>
    %271 = vector.broadcast %268 : vector<1x128xf32> to vector<2x128xf32>
    %272 = arith.mulf %271, %109 : vector<2x128xf32>
    %273 = vector.broadcast %269 : vector<1x128xf32> to vector<2x128xf32>
    %274 = arith.mulf %273, %121 : vector<2x128xf32>
    %275 = arith.addf %272, %274 : vector<2x128xf32>
    %276 = vector.broadcast %270 : vector<1x128xf32> to vector<2x128xf32>
    %277 = arith.mulf %276, %264 : vector<2x128xf32>
    %278 = arith.addf %275, %277 : vector<2x128xf32>
    %279 = vector.broadcast %268 : vector<1x128xf32> to vector<2x128xf32>
    %280 = arith.mulf %279, %121 : vector<2x128xf32>
    %281 = vector.broadcast %269 : vector<1x128xf32> to vector<2x128xf32>
    %282 = arith.mulf %281, %264 : vector<2x128xf32>
    %283 = arith.addf %280, %282 : vector<2x128xf32>
    %284 = vector.broadcast %270 : vector<1x128xf32> to vector<2x128xf32>
    %285 = arith.mulf %284, %267 : vector<2x128xf32>
    %286 = arith.addf %283, %285 : vector<2x128xf32>
    %287 = arith.addf %239, %278 : vector<2x128xf32>
    %288 = arith.addf %240, %286 : vector<2x128xf32>
    %c19 = arith.constant 19 : index
    %c0_50 = arith.constant 0 : index
    %289 = vector.load %arg2[%c19, %c0_50] : memref<26x128xf32, #tpu.memory_space<vmem>>, vector<1x128xf32>
    %c21 = arith.constant 21 : index
    %c0_51 = arith.constant 0 : index
    %290 = vector.load %arg2[%c21, %c0_51] : memref<26x128xf32, #tpu.memory_space<vmem>>, vector<1x128xf32>
    %c23 = arith.constant 23 : index
    %c0_52 = arith.constant 0 : index
    %291 = vector.load %arg2[%c23, %c0_52] : memref<26x128xf32, #tpu.memory_space<vmem>>, vector<1x128xf32>
    %292 = vector.broadcast %289 : vector<1x128xf32> to vector<2x128xf32>
    %293 = arith.mulf %292, %109 : vector<2x128xf32>
    %294 = vector.broadcast %290 : vector<1x128xf32> to vector<2x128xf32>
    %295 = arith.mulf %294, %121 : vector<2x128xf32>
    %296 = arith.addf %293, %295 : vector<2x128xf32>
    %297 = vector.broadcast %291 : vector<1x128xf32> to vector<2x128xf32>
    %298 = arith.mulf %297, %264 : vector<2x128xf32>
    %299 = arith.addf %296, %298 : vector<2x128xf32>
    %300 = vector.broadcast %289 : vector<1x128xf32> to vector<2x128xf32>
    %301 = arith.mulf %300, %121 : vector<2x128xf32>
    %302 = vector.broadcast %290 : vector<1x128xf32> to vector<2x128xf32>
    %303 = arith.mulf %302, %264 : vector<2x128xf32>
    %304 = arith.addf %301, %303 : vector<2x128xf32>
    %305 = vector.broadcast %291 : vector<1x128xf32> to vector<2x128xf32>
    %306 = arith.mulf %305, %267 : vector<2x128xf32>
    %307 = arith.addf %304, %306 : vector<2x128xf32>
    %308 = arith.addf %260, %299 : vector<2x128xf32>
    %309 = arith.addf %261, %307 : vector<2x128xf32>
    %c24 = arith.constant 24 : index
    %c0_53 = arith.constant 0 : index
    %310 = vector.load %arg2[%c24, %c0_53] : memref<26x128xf32, #tpu.memory_space<vmem>>, vector<1x128xf32>
    %311 = arith.maximumf %287, %288 : vector<2x128xf32>
    %312 = vector.broadcast %310 : vector<1x128xf32> to vector<2x128xf32>
    %313 = arith.addf %311, %312 : vector<2x128xf32>
    %cst_54 = arith.constant 0.000000e+00 : f32
    %314 = vector.broadcast %cst_54 : f32 to vector<2x128xf32>
    %315 = arith.maximumf %313, %314 : vector<2x128xf32>
    %c25 = arith.constant 25 : index
    %c0_55 = arith.constant 0 : index
    %316 = vector.load %arg2[%c25, %c0_55] : memref<26x128xf32, #tpu.memory_space<vmem>>, vector<1x128xf32>
    %317 = arith.maximumf %308, %309 : vector<2x128xf32>
    %318 = vector.broadcast %316 : vector<1x128xf32> to vector<2x128xf32>
    %319 = arith.addf %317, %318 : vector<2x128xf32>
    %cst_56 = arith.constant 0.000000e+00 : f32
    %320 = vector.broadcast %cst_56 : f32 to vector<2x128xf32>
    %321 = arith.maximumf %319, %320 : vector<2x128xf32>
    %322 = tpu.concatenate %315, %321 in 1 : vector<2x128xf32>, vector<2x128xf32> -> vector<2x256xf32>
    %c0_57 = arith.constant 0 : index
    %c0_58 = arith.constant 0 : index
    %323 = vector.load %arg3[%c0_57, %c0_58] : memref<520x128xf32, #tpu.memory_space<vmem>>, vector<256x128xf32>
    %cst_59 = arith.constant dense<0.000000e+00> : vector<2x128xf32>
    %324 = tpu.matmul %322, %323, %cst_59 {dimension_numbers = #tpu.dot_dimension_numbers<[1], [0], [0], [1], [0, 0, 1, 1], [], []>} : vector<2x256xf32>, vector<256x128xf32>, vector<2x128xf32> -> vector<2x128xf32>
    %c512 = arith.constant 512 : index
    %c0_60 = arith.constant 0 : index
    %325 = vector.load %arg3[%c512, %c0_60] : memref<520x128xf32, #tpu.memory_space<vmem>>, vector<1x128xf32>
    %326 = vector.broadcast %325 : vector<1x128xf32> to vector<2x128xf32>
    %327 = arith.addf %324, %326 : vector<2x128xf32>
    %cst_61 = arith.constant 0.000000e+00 : f32
    %328 = vector.broadcast %cst_61 : f32 to vector<2x128xf32>
    %329 = arith.maximumf %327, %328 : vector<2x128xf32>
    %c256 = arith.constant 256 : index
    %c0_62 = arith.constant 0 : index
    %330 = vector.load %arg3[%c256, %c0_62] : memref<520x128xf32, #tpu.memory_space<vmem>>, vector<128x128xf32>
    %cst_63 = arith.constant dense<0.000000e+00> : vector<2x128xf32>
    %331 = tpu.matmul %329, %330, %cst_63 {dimension_numbers = #tpu.dot_dimension_numbers<[1], [0], [0], [1], [0, 0, 1, 1], [], []>} : vector<2x128xf32>, vector<128x128xf32>, vector<2x128xf32> -> vector<2x128xf32>
    %c513 = arith.constant 513 : index
    %c0_64 = arith.constant 0 : index
    %332 = vector.load %arg3[%c513, %c0_64] : memref<520x128xf32, #tpu.memory_space<vmem>>, vector<1x128xf32>
    %333 = vector.broadcast %332 : vector<1x128xf32> to vector<2x128xf32>
    %334 = arith.addf %331, %333 : vector<2x128xf32>
    %cst_65 = arith.constant 0.000000e+00 : f32
    %335 = vector.broadcast %cst_65 : f32 to vector<2x128xf32>
    %336 = arith.maximumf %334, %335 : vector<2x128xf32>
    %c384 = arith.constant 384 : index
    %c0_66 = arith.constant 0 : index
    %337 = vector.load %arg3[%c384, %c0_66] : memref<520x128xf32, #tpu.memory_space<vmem>>, vector<128x128xf32>
    %cst_67 = arith.constant dense<0.000000e+00> : vector<2x128xf32>
    %338 = tpu.matmul %336, %337, %cst_67 {dimension_numbers = #tpu.dot_dimension_numbers<[1], [0], [0], [1], [0, 0, 1, 1], [], []>} : vector<2x128xf32>, vector<128x128xf32>, vector<2x128xf32> -> vector<2x128xf32>
    %c514 = arith.constant 514 : index
    %c0_68 = arith.constant 0 : index
    %339 = vector.load %arg3[%c514, %c0_68] : memref<520x128xf32, #tpu.memory_space<vmem>>, vector<1x128xf32>
    %340 = vector.broadcast %339 : vector<1x128xf32> to vector<2x128xf32>
    %341 = arith.addf %338, %340 : vector<2x128xf32>
    %342 = vector.extract_strided_slice %341 {offsets = [0, 0], sizes = [2, 3], strides = [1, 1]} : vector<2x128xf32> to vector<2x3xf32>
    %c0_69 = arith.constant 0 : index
    %c0_70 = arith.constant 0 : index
    %343 = vector.load %arg4[%c0_69, %c0_70] : memref<2x3xf32, #tpu.memory_space<vmem>>, vector<2x3xf32>
    tpu.vector_store %arg4[%c0_69, %c0_70], %342 {strides = array<i32>} : memref<2x3xf32, #tpu.memory_space<vmem>>, vector<2x3xf32>,
    return
  }
}

</mosaic_0001>

<llo_original>
// kernel: starnet_forward.1
$region0: #{starnet_forward.1}
  #allocation0 [shape = 'u32[]', space=smem, size = 0x4, offset = 0x4, fixed_abs, tag = 'smem constant byte address 0x4 - core index']
  #allocation1 [shape = 'u32[144,128]{1,0:T(1,128)}', space=vmem, size = 0x12000, scoped, tag = 'internal scratch']
  %s0 = inlined_call_operand.vmem [shape: f32[2,2,128], index: 0, kind: input, shape index: {}]
  %s1 = inlined_call_operand.vmem [shape: f32[16], index: 1, kind: input, shape index: {}]
  %s2 = inlined_call_operand.vmem [shape: f32[26,128], index: 2, kind: input, shape index: {}]
  %s3 = inlined_call_operand.hbm [shape: f32[520,128], index: 3, kind: input, shape index: {}]
  %s4 = inlined_call_operand.hbm [shape: f32[2,3], index: 4, kind: output, shape index: {}]
  %s5 = sld [smem:[#allocation0]]
  $region34: #{starnet_forward.1} parent=0
    _
  %s7 = ssub.s32 1, %s5
  %s8 = scalar_select 0, %s7, %s5
  $region1: #{starnet_forward.1} parent=0
    #allocation2 [shape = 'u8[512]{0}', space=smem, size = 0x200, scoped, tag = 'input window, operand 1, single buffered']
    #allocation3 [shape = 's32[1]{0}', space=sflag, size = 0x4, scoped, tag = 'scoped memory for starnet_forward.1']
    #allocation4 [shape = 's32[1]{0}', space=sflag, size = 0x4, scoped, tag = 'scoped memory for starnet_forward.1']
    #allocation5 [shape = 's32[1]{0}', space=sflag, size = 0x4, scoped, tag = 'scoped memory for starnet_forward.1']
    #allocation6 [shape = 'u8[266240]{0}', space=vmem, size = 0x41000, scoped, tag = 'input window, operand 3, single buffered']
    #allocation7 [shape = 'u8[1024]{0}', space=vmem, size = 0x400, scoped, tag = 'output window, operand 0, single buffered']
    %9 = vsyncpa [#allocation5], 0
    %10 = vsyncpa [#allocation3], 0
    %11 = vsyncpa [#allocation4], 0
    // Predicated region
    $region2: #{starnet_forward.1} parent=1 // pred_check
      _
    $region3: #{starnet_forward.1} parent=1 // pred_check_branch
      %13 = sbr.rel (0) target = $region5
    $region4: #{starnet_forward.1} parent=1 // pred_region
      _
    $region5: #{starnet_forward.1} parent=1 // pred_fallthru
      _
    // Predicated region
    $region6: #{starnet_forward.1} parent=1 // pred_check
      _
    $region7: #{starnet_forward.1} parent=1 // pred_check_branch
      %15 = sbr.rel (0) target = $region9
    $region8: #{starnet_forward.1} parent=1 // pred_region
      %s17 = ssub.s32 16, 16
      %18 = vsyncadd [#allocation5], %s17
      %s20 = sshll.u32 %s1, 4
      %s21 = int_to_ptr.vmem [resolvable:$true] %s20
      %23 = dma.vmem_to_smem %s21, 16, [#allocation2], [#allocation5]
    $region9: #{starnet_forward.1} parent=1 // pred_fallthru
      _
    // Predicated region
    $region10: #{starnet_forward.1} parent=1 // pred_check
      _
    $region11: #{starnet_forward.1} parent=1 // pred_check_branch
      %25 = sbr.rel (0) target = $region13
    $region12: #{starnet_forward.1} parent=1 // pred_region
      _
    $region13: #{starnet_forward.1} parent=1 // pred_fallthru
      _
    // Predicated region
    $region14: #{starnet_forward.1} parent=1 // pred_check
      _
    $region15: #{starnet_forward.1} parent=1 // pred_check_branch
      %27 = sbr.rel (0) target = $region17
    $region16: #{starnet_forward.1} parent=1 // pred_region
      %s29 = ssub.s32 8320, 8320
      %30 = vsyncadd [#allocation3], %s29
      %s31 = sshll.u32 [#allocation6], 4
      %s32 = int_to_ptr.vmem [resolvable:$true] %s31
      %37 = dma.hbm_to_vmem [thread:$0]  %s3, 8320, %s32, [#allocation3], 128, 128, 8
    $region17: #{starnet_forward.1} parent=1 // pred_fallthru
      _
    // Predicated region
    $region18: #{starnet_forward.1} parent=1 // pred_check
      _
    $region19: #{starnet_forward.1} parent=1 // pred_check_branch
      %39 = sbr.rel (0) target = $region21
    $region20: #{starnet_forward.1} parent=1 // pred_region
      %40 = dma.done [#allocation5], 16
    $region21: #{starnet_forward.1} parent=1 // pred_fallthru
      _
    // Predicated region
    $region22: #{starnet_forward.1} parent=1 // pred_check
      _
    $region23: #{starnet_forward.1} parent=1 // pred_check_branch
      %42 = sbr.rel (0) target = $region25
    $region24: #{starnet_forward.1} parent=1 // pred_region
      %43 = dma.done [#allocation3], 8320
    $region25: #{starnet_forward.1} parent=1 // pred_fallthru
      _
    %44 = sfence
    %v45 = vld [vmem:[%s0] sm:$0x3]
    %s46 = scalar_lea.vmem %s0, 2
    %v47 = vld [vmem:[%s46] sm:$0x3]
    %49 = vrot.lane.b32.xlu0 %v45, 127
    %v50 = vpop.permute.xlu0 %49
    %53 = vrot.lane.b32.xlu0 %v47, 127
    %v54 = vpop.permute.xlu0 %53
    %s56 = sld [smem:[#allocation2]]
    %s57 = sld [smem:[#allocation2 + $0x1]]
    %s58 = sld [smem:[#allocation2 + $0x2]]
    %s59 = sld [smem:[#allocation2 + $0xc]]
    %v60 = vstv %s56
    %v61 = vmul.f32 %v60, %v45
    %v62 = vstv %s57
    %v63 = vmul.f32 %v62, %v47
    %v64 = vadd.f32 %v61, %v63
    %v65 = vstv %s58
    %v66 = vmul.f32 %v65, %v50
    %v67 = vadd.f32 %v64, %v66
    %v68 = vstv %s59
    %v69 = vadd.f32 %v67, %v68
    %v70 = vmax.f32 %v69, 0.0
    %v71 = vmul.f32 %v60, %v47
    %v72 = vmul.f32 %v62, %v50
    %v73 = vadd.f32 %v71, %v72
    %v74 = vmul.f32 %v65, %v54
    %v75 = vadd.f32 %v73, %v74
    %v76 = vadd.f32 %v75, %v68
    %v77 = vmax.f32 %v76, 0.0
    %s78 = sld [smem:[#allocation2 + $0x3]]
    %s79 = sld [smem:[#allocation2 + $0x4]]
    %s80 = sld [smem:[#allocation2 + $0x5]]
    %s81 = sld [smem:[#allocation2 + $0xd]]
    %v82 = vstv %s78
    %v83 = vmul.f32 %v82, %v45
    %v84 = vstv %s79
    %v85 = vmul.f32 %v84, %v47
    %v86 = vadd.f32 %v83, %v85
    %v87 = vstv %s80
    %v88 = vmul.f32 %v87, %v50
    %v89 = vadd.f32 %v86, %v88
    %v90 = vstv %s81
    %v91 = vadd.f32 %v89, %v90
    %v92 = vmax.f32 %v91, 0.0
    %v93 = vmul.f32 %v82, %v47
    %v94 = vmul.f32 %v84, %v50
    %v95 = vadd.f32 %v93, %v94
    %v96 = vmul.f32 %v87, %v54
    %v97 = vadd.f32 %v95, %v96
    %v98 = vadd.f32 %v97, %v90
    %v99 = vmax.f32 %v98, 0.0
    %s100 = sld [smem:[#allocation2 + $0x6]]
    %s101 = sld [smem:[#allocation2 + $0x7]]
    %s102 = sld [smem:[#allocation2 + $0x8]]
    %s103 = sld [smem:[#allocation2 + $0xe]]
    %v104 = vstv %s100
    %v105 = vmul.f32 %v104, %v45
    %v106 = vstv %s101
    %v107 = vmul.f32 %v106, %v47
    %v108 = vadd.f32 %v105, %v107
    %v109 = vstv %s102
    %v110 = vmul.f32 %v109, %v50
    %v111 = vadd.f32 %v108, %v110
    %v112 = vstv %s103
    %v113 = vadd.f32 %v111, %v112
    %v114 = vmax.f32 %v113, 0.0
    %v115 = vmul.f32 %v104, %v47
    %v116 = vmul.f32 %v106, %v50
    %v117 = vadd.f32 %v115, %v116
    %v118 = vmul.f32 %v109, %v54
    %v119 = vadd.f32 %v117, %v118
    %v120 = vadd.f32 %v119, %v112
    %v121 = vmax.f32 %v120, 0.0
    %s122 = sld [smem:[#allocation2 + $0x9]]
    %s123 = sld [smem:[#allocation2 + $0xa]]
    %s124 = sld [smem:[#allocation2 + $0xb]]
    %s125 = sld [smem:[#allocation2 + $0xf]]
    %v126 = vstv %s122
    %v127 = vmul.f32 %v126, %v45
    %v128 = vstv %s123
    %v129 = vmul.f32 %v128, %v47
    %v130 = vadd.f32 %v127, %v129
    %v131 = vstv %s124
    %v132 = vmul.f32 %v131, %v50
    %v133 = vadd.f32 %v130, %v132
    %v134 = vstv %s125
    %v135 = vadd.f32 %v133, %v134
    %v136 = vmax.f32 %v135, 0.0
    %v137 = vmul.f32 %v126, %v47
    %v138 = vmul.f32 %v128, %v50
    %v139 = vadd.f32 %v137, %v138
    %v140 = vmul.f32 %v131, %v54
    %v141 = vadd.f32 %v139, %v140
    %v142 = vadd.f32 %v141, %v134
    %v143 = vmax.f32 %v142, 0.0
    %145 = vrot.lane.b32.xlu0 %v70, 127
    %v146 = vpop.permute.xlu0 %145
    %149 = vrot.lane.b32.xlu0 %v77, 127
    %v150 = vpop.permute.xlu0 %149
    %v152 = vld [vmem:[%s2] sm:$0x1]
    %v153 = vld [vmem:[%s2 + $0x2] sm:$0x1]
    %v154 = vld [vmem:[%s2 + $0x4] sm:$0x1]
    %v155 = vlaneseq
    %v156 = vshrl.u32 %v155, 7
    %v157 = vsub.s32 0, %v156
    %v158 = vrot.slane %v152, %v157
    %v159 = vmul.f32 %v158, %v70
    %v160 = vlaneseq
    %v161 = vshrl.u32 %v160, 7
    %v162 = vsub.s32 0, %v161
    %v163 = vrot.slane %v153, %v162
    %v164 = vmul.f32 %v163, %v77
    %v165 = vadd.f32 %v159, %v164
    %v166 = vlaneseq
    %v167 = vshrl.u32 %v166, 7
    %v168 = vsub.s32 0, %v167
    %v169 = vrot.slane %v154, %v168
    %v170 = vmul.f32 %v169, %v146
    %v171 = vadd.f32 %v165, %v170
    %v172 = vmul.f32 %v158, %v77
    %v173 = vmul.f32 %v163, %v146
    %v174 = vadd.f32 %v172, %v173
    %v175 = vmul.f32 %v169, %v150
    %v176 = vadd.f32 %v174, %v175
    %v177 = vld [vmem:[%s2 + $0x1] sm:$0x1]
    %v178 = vld [vmem:[%s2 + $0x3] sm:$0x1]
    %v179 = vld [vmem:[%s2 + $0x5] sm:$0x1]
    %v180 = vlaneseq
    %v181 = vshrl.u32 %v180, 7
    %v182 = vsub.s32 0, %v181
    %v183 = vrot.slane %v177, %v182
    %v184 = vmul.f32 %v183, %v70
    %v185 = vlaneseq
    %v186 = vshrl.u32 %v185, 7
    %v187 = vsub.s32 0, %v186
    %v188 = vrot.slane %v178, %v187
    %v189 = vmul.f32 %v188, %v77
    %v190 = vadd.f32 %v184, %v189
    %v191 = vlaneseq
    %v192 = vshrl.u32 %v191, 7
    %v193 = vsub.s32 0, %v192
    %v194 = vrot.slane %v179, %v193
    %v195 = vmul.f32 %v194, %v146
    %v196 = vadd.f32 %v190, %v195
    %v197 = vmul.f32 %v183, %v77
    %v198 = vmul.f32 %v188, %v146
    %v199 = vadd.f32 %v197, %v198
    %v200 = vmul.f32 %v194, %v150
    %v201 = vadd.f32 %v199, %v200
    %203 = vrot.lane.b32.xlu0 %v92, 127
    %v204 = vpop.permute.xlu0 %203
    %207 = vrot.lane.b32.xlu0 %v99, 127
    %v208 = vpop.permute.xlu0 %207
    %v210 = vld [vmem:[%s2 + $0x6] sm:$0x1]
    %v211 = vld [vmem:[%s2 + $0x8] sm:$0x1]
    %v212 = vld [vmem:[%s2 + $0xa] sm:$0x1]
    %v213 = vlaneseq
    %v214 = vshrl.u32 %v213, 7
    %v215 = vsub.s32 0, %v214
    %v216 = vrot.slane %v210, %v215
    %v217 = vmul.f32 %v216, %v92
    %v218 = vlaneseq
    %v219 = vshrl.u32 %v218, 7
    %v220 = vsub.s32 0, %v219
    %v221 = vrot.slane %v211, %v220
    %v222 = vmul.f32 %v221, %v99
    %v223 = vadd.f32 %v217, %v222
    %v224 = vlaneseq
    %v225 = vshrl.u32 %v224, 7
    %v226 = vsub.s32 0, %v225
    %v227 = vrot.slane %v212, %v226
    %v228 = vmul.f32 %v227, %v204
    %v229 = vadd.f32 %v223, %v228
    %v230 = vmul.f32 %v216, %v99
    %v231 = vmul.f32 %v221, %v204
    %v232 = vadd.f32 %v230, %v231
    %v233 = vmul.f32 %v227, %v208
    %v234 = vadd.f32 %v232, %v233
    %v235 = vadd.f32 %v171, %v229
    %v236 = vadd.f32 %v176, %v234
    %v237 = vld [vmem:[%s2 + $0x7] sm:$0x1]
    %v238 = vld [vmem:[%s2 + $0x9] sm:$0x1]
    %v239 = vld [vmem:[%s2 + $0xb] sm:$0x1]
    %v240 = vlaneseq
    %v241 = vshrl.u32 %v240, 7
    %v242 = vsub.s32 0, %v241
    %v243 = vrot.slane %v237, %v242
    %v244 = vmul.f32 %v243, %v92
    %v245 = vlaneseq
    %v246 = vshrl.u32 %v245, 7
    %v247 = vsub.s32 0, %v246
    %v248 = vrot.slane %v238, %v247
    %v249 = vmul.f32 %v248, %v99
    %v250 = vadd.f32 %v244, %v249
    %v251 = vlaneseq
    %v252 = vshrl.u32 %v251, 7
    %v253 = vsub.s32 0, %v252
    %v254 = vrot.slane %v239, %v253
    %v255 = vmul.f32 %v254, %v204
    %v256 = vadd.f32 %v250, %v255
    %v257 = vmul.f32 %v243, %v99
    %v258 = vmul.f32 %v248, %v204
    %v259 = vadd.f32 %v257, %v258
    %v260 = vmul.f32 %v254, %v208
    %v261 = vadd.f32 %v259, %v260
    %v262 = vadd.f32 %v196, %v256
    %v263 = vadd.f32 %v201, %v261
    %265 = vrot.lane.b32.xlu0 %v114, 127
    %v266 = vpop.permute.xlu0 %265
    %269 = vrot.lane.b32.xlu0 %v121, 127
    %v270 = vpop.permute.xlu0 %269
    %v272 = vld [vmem:[%s2 + $0xc] sm:$0x1]
    %v273 = vld [vmem:[%s2 + $0xe] sm:$0x1]
    %v274 = vld [vmem:[%s2 + $0x10] sm:$0x1]
    %v275 = vlaneseq
    %v276 = vshrl.u32 %v275, 7
    %v277 = vsub.s32 0, %v276
    %v278 = vrot.slane %v272, %v277
    %v279 = vmul.f32 %v278, %v114
    %v280 = vlaneseq
    %v281 = vshrl.u32 %v280, 7
    %v282 = vsub.s32 0, %v281
    %v283 = vrot.slane %v273, %v282
    %v284 = vmul.f32 %v283, %v121
    %v285 = vadd.f32 %v279, %v284
    %v286 = vlaneseq
    %v287 = vshrl.u32 %v286, 7
    %v288 = vsub.s32 0, %v287
    %v289 = vrot.slane %v274, %v288
    %v290 = vmul.f32 %v289, %v266
    %v291 = vadd.f32 %v285, %v290
    %v292 = vmul.f32 %v278, %v121
    %v293 = vmul.f32 %v283, %v266
    %v294 = vadd.f32 %v292, %v293
    %v295 = vmul.f32 %v289, %v270
    %v296 = vadd.f32 %v294, %v295
    %v297 = vadd.f32 %v235, %v291
    %v298 = vadd.f32 %v236, %v296
    %v299 = vld [vmem:[%s2 + $0xd] sm:$0x1]
    %v300 = vld [vmem:[%s2 + $0xf] sm:$0x1]
    %v301 = vld [vmem:[%s2 + $0x11] sm:$0x1]
    %v302 = vlaneseq
    %v303 = vshrl.u32 %v302, 7
    %v304 = vsub.s32 0, %v303
    %v305 = vrot.slane %v299, %v304
    %v306 = vmul.f32 %v305, %v114
    %v307 = vlaneseq
    %v308 = vshrl.u32 %v307, 7
    %v309 = vsub.s32 0, %v308
    %v310 = vrot.slane %v300, %v309
    %v311 = vmul.f32 %v310, %v121
    %v312 = vadd.f32 %v306, %v311
    %v313 = vlaneseq
    %v314 = vshrl.u32 %v313, 7
    %v315 = vsub.s32 0, %v314
    %v316 = vrot.slane %v301, %v315
    %v317 = vmul.f32 %v316, %v266
    %v318 = vadd.f32 %v312, %v317
    %v319 = vmul.f32 %v305, %v121
    %v320 = vmul.f32 %v310, %v266
    %v321 = vadd.f32 %v319, %v320
    %v322 = vmul.f32 %v316, %v270
    %v323 = vadd.f32 %v321, %v322
    %v324 = vadd.f32 %v262, %v318
    %v325 = vadd.f32 %v263, %v323
    %327 = vrot.lane.b32.xlu0 %v136, 127
    %v328 = vpop.permute.xlu0 %327
    %331 = vrot.lane.b32.xlu0 %v143, 127
    %v332 = vpop.permute.xlu0 %331
    %v334 = vld [vmem:[%s2 + $0x12] sm:$0x1]
    %v335 = vld [vmem:[%s2 + $0x14] sm:$0x1]
    %v336 = vld [vmem:[%s2 + $0x16] sm:$0x1]
    %v337 = vlaneseq
    %v338 = vshrl.u32 %v337, 7
    %v339 = vsub.s32 0, %v338
    %v340 = vrot.slane %v334, %v339
    %v341 = vmul.f32 %v340, %v136
    %v342 = vlaneseq
    %v343 = vshrl.u32 %v342, 7
    %v344 = vsub.s32 0, %v343
    %v345 = vrot.slane %v335, %v344
    %v346 = vmul.f32 %v345, %v143
    %v347 = vadd.f32 %v341, %v346
    %v348 = vlaneseq
    %v349 = vshrl.u32 %v348, 7
    %v350 = vsub.s32 0, %v349
    %v351 = vrot.slane %v336, %v350
    %v352 = vmul.f32 %v351, %v328
    %v353 = vadd.f32 %v347, %v352
    %v354 = vmul.f32 %v340, %v143
    %v355 = vmul.f32 %v345, %v328
    %v356 = vadd.f32 %v354, %v355
    %v357 = vmul.f32 %v351, %v332
    %v358 = vadd.f32 %v356, %v357
    %v359 = vadd.f32 %v297, %v353
    %v360 = vadd.f32 %v298, %v358
    %v361 = vld [vmem:[%s2 + $0x13] sm:$0x1]
    %v362 = vld [vmem:[%s2 + $0x15] sm:$0x1]
    %v363 = vld [vmem:[%s2 + $0x17] sm:$0x1]
    %v364 = vlaneseq
    %v365 = vshrl.u32 %v364, 7
    %v366 = vsub.s32 0, %v365
    %v367 = vrot.slane %v361, %v366
    %v368 = vmul.f32 %v367, %v136
    %v369 = vlaneseq
    %v370 = vshrl.u32 %v369, 7
    %v371 = vsub.s32 0, %v370
    %v372 = vrot.slane %v362, %v371
    %v373 = vmul.f32 %v372, %v143
    %v374 = vadd.f32 %v368, %v373
    %v375 = vlaneseq
    %v376 = vshrl.u32 %v375, 7
    %v377 = vsub.s32 0, %v376
    %v378 = vrot.slane %v363, %v377
    %v379 = vmul.f32 %v378, %v328
    %v380 = vadd.f32 %v374, %v379
    %v381 = vmul.f32 %v367, %v143
    %v382 = vmul.f32 %v372, %v328
    %v383 = vadd.f32 %v381, %v382
    %v384 = vmul.f32 %v378, %v332
    %v385 = vadd.f32 %v383, %v384
    %v386 = vadd.f32 %v324, %v380
    %v387 = vadd.f32 %v325, %v385
    %v388 = vld [vmem:[%s2 + $0x18] sm:$0x1]
    %v389 = vmax.f32 %v359, %v360
    %v390 = vlaneseq
    %v391 = vshrl.u32 %v390, 7
    %v392 = vsub.s32 0, %v391
    %v393 = vrot.slane %v388, %v392
    %v394 = vadd.f32 %v389, %v393
    %v395 = vmax.f32 %v394, 0.0
    %v396 = vld [vmem:[%s2 + $0x19] sm:$0x1]
    %v397 = vmax.f32 %v386, %v387
    %v398 = vlaneseq
    %v399 = vshrl.u32 %v398, 7
    %v400 = vsub.s32 0, %v399
    %v401 = vrot.slane %v396, %v400
    %v402 = vadd.f32 %v397, %v401
    %v403 = vmax.f32 %v402, 0.0
    %v404 = vld [vmem:[#allocation6] sm:$0xff]
    %v405 = vld [vmem:[#allocation6 + $0x8] sm:$0xff]
    %v406 = vld [vmem:[#allocation6 + $0x10] sm:$0xff]
    %v407 = vld [vmem:[#allocation6 + $0x18] sm:$0xff]
    %v408 = vld [vmem:[#allocation6 + $0x20] sm:$0xff]
    %v409 = vld [vmem:[#allocation6 + $0x28] sm:$0xff]
    %v410 = vld [vmem:[#allocation6 + $0x30] sm:$0xff]
    %v411 = vld [vmem:[#allocation6 + $0x38] sm:$0xff]
    %v412 = vld [vmem:[#allocation6 + $0x40] sm:$0xff]
    %v413 = vld [vmem:[#allocation6 + $0x48] sm:$0xff]
    %v414 = vld [vmem:[#allocation6 + $0x50] sm:$0xff]
    %v415 = vld [vmem:[#allocation6 + $0x58] sm:$0xff]
    %v416 = vld [vmem:[#allocation6 + $0x60] sm:$0xff]
    %v417 = vld [vmem:[#allocation6 + $0x68] sm:$0xff]
    %v418 = vld [vmem:[#allocation6 + $0x70] sm:$0xff]
    %v419 = vld [vmem:[#allocation6 + $0x78] sm:$0xff]
    %v420 = vld [vmem:[#allocation6 + $0x80] sm:$0xff]
    %v421 = vld [vmem:[#allocation6 + $0x88] sm:$0xff]
    %v422 = vld [vmem:[#allocation6 + $0x90] sm:$0xff]
    %v423 = vld [vmem:[#allocation6 + $0x98] sm:$0xff]
    %v424 = vld [vmem:[#allocation6 + $0xa0] sm:$0xff]
    %v425 = vld [vmem:[#allocation6 + $0xa8] sm:$0xff]
    %v426 = vld [vmem:[#allocation6 + $0xb0] sm:$0xff]
    %v427 = vld [vmem:[#allocation6 + $0xb8] sm:$0xff]
    %v428 = vld [vmem:[#allocation6 + $0xc0] sm:$0xff]
    %v429 = vld [vmem:[#allocation6 + $0xc8] sm:$0xff]
    %v430 = vld [vmem:[#allocation6 + $0xd0] sm:$0xff]
    %v431 = vld [vmem:[#allocation6 + $0xd8] sm:$0xff]
    %v432 = vld [vmem:[#allocation6 + $0xe0] sm:$0xff]
    %v433 = vld [vmem:[#allocation6 + $0xe8] sm:$0xff]
    %v434 = vld [vmem:[#allocation6 + $0xf0] sm:$0xff]
    %v435 = vld [vmem:[#allocation6 + $0xf8] sm:$0xff]
    %v436 = vld [vmem:[#allocation6 + $0x200] sm:$0x1]
    %v437 = vlaneseq
    %v438 = vshrl.u32 %v437, 7
    %v439 = vsub.s32 0, %v438
    %v440 = vrot.slane %v436, %v439
    %441 = vmatprep.subr.mxu0 0.0
    %442 = vmatpush1.msra.mxu0 %v404
    %443 = vmatprep.subr.mxu0 0.0
    %444 = vmatpush1.msra.mxu0 %v405
    %445 = vmatprep.subr.mxu0 0.0
    %446 = vmatpush1.msra.mxu0 %v406
    %447 = vmatprep.subr.mxu0 0.0
    %448 = vmatpush1.msra.mxu0 %v407
    %449 = vmatprep.subr.mxu0 0.0
    %450 = vmatpush1.msra.mxu0 %v408
    %451 = vmatprep.subr.mxu0 0.0
    %452 = vmatpush1.msra.mxu0 %v409
    %453 = vmatprep.subr.mxu0 0.0
    %454 = vmatpush1.msra.mxu0 %v410
    %455 = vmatprep.subr.mxu0 0.0
    %456 = vmatpush1.msra.mxu0 %v411
    %457 = vmatprep.subr.mxu0 0.0
    %458 = vmatpush1.msra.mxu0 %v412
    %459 = vmatprep.subr.mxu0 0.0
    %460 = vmatpush1.msra.mxu0 %v413
    %461 = vmatprep.subr.mxu0 0.0
    %462 = vmatpush1.msra.mxu0 %v414
    %463 = vmatprep.subr.mxu0 0.0
    %464 = vmatpush1.msra.mxu0 %v415
    %465 = vmatprep.subr.mxu0 0.0
    %466 = vmatpush1.msra.mxu0 %v416
    %467 = vmatprep.subr.mxu0 0.0
    %468 = vmatpush1.msra.mxu0 %v417
    %469 = vmatprep.subr.mxu0 0.0
    %470 = vmatpush1.msra.mxu0 %v418
    %471 = vmatprep.subr.mxu0 0.0
    %472 = vmatpush1.msra.mxu0 %v419
    %473 = vmatprep.subr.mxu0 0.0
    %474 = vmatpush1.msra.mxu0 %v420
    %475 = vmatprep.subr.mxu0 0.0
    %476 = vmatpush1.msra.mxu0 %v421
    %477 = vmatprep.subr.mxu0 0.0
    %478 = vmatpush1.msra.mxu0 %v422
    %479 = vmatprep.subr.mxu0 0.0
    %480 = vmatpush1.msra.mxu0 %v423
    %481 = vmatprep.subr.mxu0 0.0
    %482 = vmatpush1.msra.mxu0 %v424
    %483 = vmatprep.subr.mxu0 0.0
    %484 = vmatpush1.msra.mxu0 %v425
    %485 = vmatprep.subr.mxu0 0.0
    %486 = vmatpush1.msra.mxu0 %v426
    %487 = vmatprep.subr.mxu0 0.0
    %488 = vmatpush1.msra.mxu0 %v427
    %489 = vmatprep.subr.mxu0 0.0
    %490 = vmatpush1.msra.mxu0 %v428
    %491 = vmatprep.subr.mxu0 0.0
    %492 = vmatpush1.msra.mxu0 %v429
    %493 = vmatprep.subr.mxu0 0.0
    %494 = vmatpush1.msra.mxu0 %v430
    %495 = vmatprep.subr.mxu0 0.0
    %496 = vmatpush1.msra.mxu0 %v431
    %497 = vmatprep.subr.mxu0 0.0
    %498 = vmatpush1.msra.mxu0 %v432
    %499 = vmatprep.subr.mxu0 0.0
    %500 = vmatpush1.msra.mxu0 %v433
    %501 = vmatprep.subr.mxu0 0.0
    %502 = vmatpush1.msra.mxu0 %v434
    %503 = vmatprep.subr.mxu0 0.0
    %504 = vmatpush1.msra.mxu0 %v435
    %505 = vmatprep.mubr.f32.mxu0 %v403
    %506 = vmatmul.mubr.f32.gmra.mrb[0].mxu0 %v395
    %v507 = vpop.f32.mrb[0].mxu0
    %v508 = vadd.f32 %v440, %v507
    %v509 = vpop.f32.mrb[0].mxu0
    %510 = vdwg.mxu0
    %v511 = vmax.f32 %v508, 0.0
    %v512 = vld [vmem:[#allocation6 + $0x100] sm:$0xff]
    %v513 = vld [vmem:[#allocation6 + $0x108] sm:$0xff]
    %v514 = vld [vmem:[#allocation6 + $0x110] sm:$0xff]
    %v515 = vld [vmem:[#allocation6 + $0x118] sm:$0xff]
    %v516 = vld [vmem:[#allocation6 + $0x120] sm:$0xff]
    %v517 = vld [vmem:[#allocation6 + $0x128] sm:$0xff]
    %v518 = vld [vmem:[#allocation6 + $0x130] sm:$0xff]
    %v519 = vld [vmem:[#allocation6 + $0x138] sm:$0xff]
    %v520 = vld [vmem:[#allocation6 + $0x140] sm:$0xff]
    %v521 = vld [vmem:[#allocation6 + $0x148] sm:$0xff]
    %v522 = vld [vmem:[#allocation6 + $0x150] sm:$0xff]
    %v523 = vld [vmem:[#allocation6 + $0x158] sm:$0xff]
    %v524 = vld [vmem:[#allocation6 + $0x160] sm:$0xff]
    %v525 = vld [vmem:[#allocation6 + $0x168] sm:$0xff]
    %v526 = vld [vmem:[#allocation6 + $0x170] sm:$0xff]
    %v527 = vld [vmem:[#allocation6 + $0x178] sm:$0xff]
    %v528 = vld [vmem:[#allocation6 + $0x201] sm:$0x1]
    %v529 = vlaneseq
    %v530 = vshrl.u32 %v529, 7
    %v531 = vsub.s32 0, %v530
    %v532 = vrot.slane %v528, %v531
    %533 = vmatprep.subr.mxu0 0.0
    %534 = vmatpush1.msra.mxu0 %v512
    %535 = vmatprep.subr.mxu0 0.0
    %536 = vmatpush1.msra.mxu0 %v513
    %537 = vmatprep.subr.mxu0 0.0
    %538 = vmatpush1.msra.mxu0 %v514
    %539 = vmatprep.subr.mxu0 0.0
    %540 = vmatpush1.msra.mxu0 %v515
    %541 = vmatprep.subr.mxu0 0.0
    %542 = vmatpush1.msra.mxu0 %v516
    %543 = vmatprep.subr.mxu0 0.0
    %544 = vmatpush1.msra.mxu0 %v517
    %545 = vmatprep.subr.mxu0 0.0
    %546 = vmatpush1.msra.mxu0 %v518
    %547 = vmatprep.subr.mxu0 0.0
    %548 = vmatpush1.msra.mxu0 %v519
    %549 = vmatprep.subr.mxu0 0.0
    %550 = vmatpush1.msra.mxu0 %v520
    %551 = vmatprep.subr.mxu0 0.0
    %552 = vmatpush1.msra.mxu0 %v521
    %553 = vmatprep.subr.mxu0 0.0
    %554 = vmatpush1.msra.mxu0 %v522
    %555 = vmatprep.subr.mxu0 0.0
    %556 = vmatpush1.msra.mxu0 %v523
    %557 = vmatprep.subr.mxu0 0.0
    %558 = vmatpush1.msra.mxu0 %v524
    %559 = vmatprep.subr.mxu0 0.0
    %560 = vmatpush1.msra.mxu0 %v525
    %561 = vmatprep.subr.mxu0 0.0
    %562 = vmatpush1.msra.mxu0 %v526
    %563 = vmatprep.subr.mxu0 0.0
    %564 = vmatpush1.msra.mxu0 %v527
    %565 = vmatprep.subr.mxu0 0.0
    %566 = vmatpush1.msra.mxu0 0.0
    %567 = vmatprep.subr.mxu0 0.0
    %568 = vmatpush1.msra.mxu0 0.0
    %569 = vmatprep.subr.mxu0 0.0
    %570 = vmatpush1.msra.mxu0 0.0
    %571 = vmatprep.subr.mxu0 0.0
    %572 = vmatpush1.msra.mxu0 0.0
    %573 = vmatprep.subr.mxu0 0.0
    %574 = vmatpush1.msra.mxu0 0.0
    %575 = vmatprep.subr.mxu0 0.0
    %576 = vmatpush1.msra.mxu0 0.0
    %577 = vmatprep.subr.mxu0 0.0
    %578 = vmatpush1.msra.mxu0 0.0
    %579 = vmatprep.subr.mxu0 0.0
    %580 = vmatpush1.msra.mxu0 0.0
    %581 = vmatprep.subr.mxu0 0.0
    %582 = vmatpush1.msra.mxu0 0.0
    %583 = vmatprep.subr.mxu0 0.0
    %584 = vmatpush1.msra.mxu0 0.0
    %585 = vmatprep.subr.mxu0 0.0
    %586 = vmatpush1.msra.mxu0 0.0
    %587 = vmatprep.subr.mxu0 0.0
    %588 = vmatpush1.msra.mxu0 0.0
    %589 = vmatprep.subr.mxu0 0.0
    %590 = vmatpush1.msra.mxu0 0.0
    %591 = vmatprep.subr.mxu0 0.0
    %592 = vmatpush1.msra.mxu0 0.0
    %593 = vmatprep.subr.mxu0 0.0
    %594 = vmatpush1.msra.mxu0 0.0
    %595 = vmatprep.subr.mxu0 0.0
    %596 = vmatpush1.msra.mxu0 0.0
    %597 = vmatprep.mubr.f32.mxu0 0.0
    %598 = vmatmul.mubr.f32.gmra.mrb[0].mxu0 %v511
    %v599 = vpop.f32.mrb[0].mxu0
    %v600 = vadd.f32 %v532, %v599
    %v601 = vpop.f32.mrb[0].mxu0
    %602 = vdwg.mxu0
    %v603 = vmax.f32 %v600, 0.0
    %v604 = vld [vmem:[#allocation6 + $0x180] sm:$0xff]
    %v605 = vld [vmem:[#allocation6 + $0x188] sm:$0xff]
    %v606 = vld [vmem:[#allocation6 + $0x190] sm:$0xff]
    %v607 = vld [vmem:[#allocation6 + $0x198] sm:$0xff]
    %v608 = vld [vmem:[#allocation6 + $0x1a0] sm:$0xff]
    %v609 = vld [vmem:[#allocation6 + $0x1a8] sm:$0xff]
    %v610 = vld [vmem:[#allocation6 + $0x1b0] sm:$0xff]
    %v611 = vld [vmem:[#allocation6 + $0x1b8] sm:$0xff]
    %v612 = vld [vmem:[#allocation6 + $0x1c0] sm:$0xff]
    %v613 = vld [vmem:[#allocation6 + $0x1c8] sm:$0xff]
    %v614 = vld [vmem:[#allocation6 + $0x1d0] sm:$0xff]
    %v615 = vld [vmem:[#allocation6 + $0x1d8] sm:$0xff]
    %v616 = vld [vmem:[#allocation6 + $0x1e0] sm:$0xff]
    %v617 = vld [vmem:[#allocation6 + $0x1e8] sm:$0xff]
    %v618 = vld [vmem:[#allocation6 + $0x1f0] sm:$0xff]
    %v619 = vld [vmem:[#allocation6 + $0x1f8] sm:$0xff]
    %v620 = vld [vmem:[#allocation6 + $0x202] sm:$0x1]
    %v621 = vlaneseq
    %v622 = vshrl.u32 %v621, 7
    %v623 = vsub.s32 0, %v622
    %v624 = vrot.slane %v620, %v623
    %625 = vmatprep.subr.mxu0 0.0
    %626 = vmatpush1.msra.mxu0 %v604
    %627 = vmatprep.subr.mxu0 0.0
    %628 = vmatpush1.msra.mxu0 %v605
    %629 = vmatprep.subr.mxu0 0.0
    %630 = vmatpush1.msra.mxu0 %v606
    %631 = vmatprep.subr.mxu0 0.0
    %632 = vmatpush1.msra.mxu0 %v607
    %633 = vmatprep.subr.mxu0 0.0
    %634 = vmatpush1.msra.mxu0 %v608
    %635 = vmatprep.subr.mxu0 0.0
    %636 = vmatpush1.msra.mxu0 %v609
    %637 = vmatprep.subr.mxu0 0.0
    %638 = vmatpush1.msra.mxu0 %v610
    %639 = vmatprep.subr.mxu0 0.0
    %640 = vmatpush1.msra.mxu0 %v611
    %641 = vmatprep.subr.mxu0 0.0
    %642 = vmatpush1.msra.mxu0 %v612
    %643 = vmatprep.subr.mxu0 0.0
    %644 = vmatpush1.msra.mxu0 %v613
    %645 = vmatprep.subr.mxu0 0.0
    %646 = vmatpush1.msra.mxu0 %v614
    %647 = vmatprep.subr.mxu0 0.0
    %648 = vmatpush1.msra.mxu0 %v615
    %649 = vmatprep.subr.mxu0 0.0
    %650 = vmatpush1.msra.mxu0 %v616
    %651 = vmatprep.subr.mxu0 0.0
    %652 = vmatpush1.msra.mxu0 %v617
    %653 = vmatprep.subr.mxu0 0.0
    %654 = vmatpush1.msra.mxu0 %v618
    %655 = vmatprep.subr.mxu0 0.0
    %656 = vmatpush1.msra.mxu0 %v619
    %657 = vmatprep.subr.mxu0 0.0
    %658 = vmatpush1.msra.mxu0 0.0
    %659 = vmatprep.subr.mxu0 0.0
    %660 = vmatpush1.msra.mxu0 0.0
    %661 = vmatprep.subr.mxu0 0.0
    %662 = vmatpush1.msra.mxu0 0.0
    %663 = vmatprep.subr.mxu0 0.0
    %664 = vmatpush1.msra.mxu0 0.0
    %665 = vmatprep.subr.mxu0 0.0
    %666 = vmatpush1.msra.mxu0 0.0
    %667 = vmatprep.subr.mxu0 0.0
    %668 = vmatpush1.msra.mxu0 0.0
    %669 = vmatprep.subr.mxu0 0.0
    %670 = vmatpush1.msra.mxu0 0.0
    %671 = vmatprep.subr.mxu0 0.0
    %672 = vmatpush1.msra.mxu0 0.0
    %673 = vmatprep.subr.mxu0 0.0
    %674 = vmatpush1.msra.mxu0 0.0
    %675 = vmatprep.subr.mxu0 0.0
    %676 = vmatpush1.msra.mxu0 0.0
    %677 = vmatprep.subr.mxu0 0.0
    %678 = vmatpush1.msra.mxu0 0.0
    %679 = vmatprep.subr.mxu0 0.0
    %680 = vmatpush1.msra.mxu0 0.0
    %681 = vmatprep.subr.mxu0 0.0
    %682 = vmatpush1.msra.mxu0 0.0
    %683 = vmatprep.subr.mxu0 0.0
    %684 = vmatpush1.msra.mxu0 0.0
    %685 = vmatprep.subr.mxu0 0.0
    %686 = vmatpush1.msra.mxu0 0.0
    %687 = vmatprep.subr.mxu0 0.0
    %688 = vmatpush1.msra.mxu0 0.0
    %689 = vmatprep.mubr.f32.mxu0 0.0
    %690 = vmatmul.mubr.f32.gmra.mrb[0].mxu0 %v603
    %v691 = vpop.f32.mrb[0].mxu0
    %v692 = vadd.f32 %v624, %v691
    %v693 = vpop.f32.mrb[0].mxu0
    %694 = vdwg.mxu0
    %vm695 = vcmask 17408
    %696 = vst.msk [vmem:[#allocation7] sm:$0x3] %vm695, %v692
    // Predicated region
    $region26: #{starnet_forward.1} parent=1 // pred_check
      _
    $region27: #{starnet_forward.1} parent=1 // pred_check_branch
      %698 = sbr.rel (0) target = $region29
    $region28: #{starnet_forward.1} parent=1 // pred_region
      %s700 = ssub.s32 32, 32
      %701 = vsyncadd [#allocation4], %s700
      %s703 = sshll.u32 [#allocation7], 4
      %s704 = int_to_ptr.vmem [resolvable:$true] %s703
      %706 = dma.vmem_to_hbm [thread:$0]  %s704, 32, %s4, [#allocation4]
    $region29: #{starnet_forward.1} parent=1 // pred_fallthru
      _
    // Predicated region
    $region30: #{starnet_forward.1} parent=1 // pred_check
      _
    $region31: #{starnet_forward.1} parent=1 // pred_check_branch
      %708 = sbr.rel (0) target = $region33
    $region32: #{starnet_forward.1} parent=1 // pred_region
      %709 = dma.done [#allocation4], 32
    $region33: #{starnet_forward.1} parent=1 // pred_fallthru
      _
    %710 = vsyncpa [#allocation3], 1
    %711 = vsyncpa [#allocation4], 1
    %712 = vsyncpa [#allocation5], 1

</llo_original>
